<compile_context>
chip_gen: v5e
topology: v5e:2x2
jax: 0.10.0
libtpu: 0.0.40
codegen_flags: <defaults>
</compile_context>

<pallas_src>
import functools

import jax
import jax.numpy as jnp
from jax.experimental import pallas as pl
from jax.experimental.pallas import tpu as pltpu

NUM_CLASSES = 10
PAD_CLASSES = 128          # lane-dense class dimension
NEG_BIG = -1e30            # padded-logit bias -> exp() underflows to exactly 0
FEATURE_ALIGN = 256        # MXU K/N alignment (256 on v6e/v7x, also a multiple of 128 for v5e)


def _round_up(x, m):
    return -(-x // m) * m


@functools.lru_cache(maxsize=1)
def _vmem_capacity_bytes():
    try:
        return int(pltpu.get_tpu_info().vmem_capacity_bytes)
    except Exception:
        return 64 * 1024 * 1024   # conservative default (v7x per-TC VMEM)


def mlp_kernel(x_ref, w1_ref, b1_ref, w2_ref, b2_ref, o_ref):
    # x:  (TB, DP) f32      w1: (DP, DP) bf16     b1: (1, DP) f32
    # w2: (DP, 128) bf16    b2: (1, 128) f32      o:  (TB, 128) bf16
    # Cast to bf16 in-kernel (VPU, hidden under the MXU) instead of in the wrapper.
    x = x_ref[...].astype(jnp.bfloat16)

    # Hidden layer: MyLinear + ReLU (f32 accumulate on the MXU).
    h = jnp.dot(x, w1_ref[...], preferred_element_type=jnp.float32) + b1_ref[...]
    h = jnp.maximum(h, 0.0).astype(jnp.bfloat16)

    # Output layer: Linear(d, 10) padded to 128 lanes (padded w2 columns are zero,
    # padded bias lanes are NEG_BIG -> those logits vanish under exp()).
    logits = jnp.dot(h, w2_ref[...], preferred_element_type=jnp.float32) + b2_ref[...]

    # Softmax over the class dimension (reciprocal on the EUP slot, ~free).
    m = jnp.max(logits, axis=-1, keepdims=True)
    e = jnp.exp(logits - m)
    inv = pl.reciprocal(jnp.sum(e, axis=-1, keepdims=True), approx=True)
    o_ref[...] = (e * inv).astype(o_ref.dtype)


def prepare_params(w1, b1, w2, b2):
    """One-time weight prep (outside the hot path): transpose to (in, out), zero-pad the feature
    dim to a multiple of 256, pad the class dim to 128, cast matmul operands to bf16."""
    d = w1.shape[1]
    nc = w2.shape[0]
    dp = _round_up(d, FEATURE_ALIGN)

    w1t = jnp.zeros((dp, dp), jnp.bfloat16)
    w1t = w1t.at[:d, :d].set(jnp.asarray(w1, jnp.float32).T.astype(jnp.bfloat16))
    b1_2d = jnp.zeros((1, dp), jnp.float32).at[0, :d].set(jnp.asarray(b1, jnp.float32))

    # Padded w2 columns MUST stay exactly zero (invariant the NEG_BIG bias trick relies on).
    w2t = jnp.zeros((dp, PAD_CLASSES), jnp.bfloat16)
    w2t = w2t.at[:d, :nc].set(jnp.asarray(w2, jnp.float32).T.astype(jnp.bfloat16))
    b2_pad = jnp.full((1, PAD_CLASSES), NEG_BIG, jnp.float32)
    b2_pad = b2_pad.at[0, :nc].set(jnp.asarray(b2, jnp.float32))
    return w1t, b1_2d, w2t, b2_pad


@functools.partial(jax.jit, static_argnames=("block_b",))
def mlp_forward(x_nchw, params, *, block_b=512):
    """x_nchw: (B, 1, S, S) float32. Returns softmax probabilities (B, 10) float32."""
    w1t, b1_2d, w2t, b2_pad = params
    dp = w1t.shape[0]
    B = x_nchw.shape[0]

    # nn.Flatten(): (B, 1, S, S) -> (B, S*S), row-major (matches PyTorch). Keep f32 here;
    # the bf16 cast happens inside the kernel.
    xf = x_nchw.reshape(B, -1).astype(jnp.float32)
    d = xf.shape[1]
    if d != dp:
        xf = jnp.pad(xf, ((0, 0), (0, dp - d)))

    # --- VMEM accounting (no double-counted buffer factors) ---
    vmem_cap = _vmem_capacity_bytes()
    budget = int(0.75 * vmem_cap)                               # <= 48 MiB on v7x, ~96 MiB v5e/v6e
    resident = dp * dp * 2 + dp * 4 + dp * PAD_CLASSES * 2 + PAD_CLASSES * 4
    per_row = dp * 4 + PAD_CLASSES * 2                          # f32 x tile + bf16 out tile

    # --- Batch tile: big (amortize per-step overhead), multiple of 8, VMEM-clamped ---
    tb = _round_up(min(block_b, _round_up(B, 8)), 8)
    max_tb = max(8, ((budget - resident) // (2 * per_row) // 8) * 8)
    tb = max(8, min(tb, max_tb))
    if tb >= 256:                       # MXU M-alignment on v6e/v7x
        tb = (tb // 256) * 256

    b_pad = _round_up(B, tb)
    # v7x has 2 TensorCores: make sure the "parallel" batch grid has >= 2 steps when possible.
    if b_pad // tb < 2 and tb >= 16:
        tb = _round_up(tb // 2, 8)
        b_pad = _round_up(B, tb)

    if b_pad != B:
        xf = jnp.pad(xf, ((0, b_pad - B), (0, 0)))
    grid = (b_pad // tb,)

    est_vmem = resident + 2 * tb * per_row                      # 2 = double-buffer factor, once
    cparams = {"dimension_semantics": ("parallel",)}
    if est_vmem > 12 * 1024 * 1024:
        cparams["vmem_limit_bytes"] = min(int(est_vmem * 1.5), budget)
    compiler_params = pltpu.CompilerParams(**cparams)

    cost = pl.CostEstimate(
        flops=2 * b_pad * dp * (dp + PAD_CLASSES),
        transcendentals=b_pad * PAD_CLASSES,
        bytes_accessed=(b_pad * dp * 4 + w1t.size * 2 + w2t.size * 2
                        + b1_2d.size * 4 + b2_pad.size * 4 + b_pad * PAD_CLASSES * 2),
    )

    out_pad = pl.pallas_call(
        mlp_kernel,
        out_shape=jax.ShapeDtypeStruct((b_pad, PAD_CLASSES), jnp.bfloat16),
        grid=grid,
        in_specs=[
            pl.BlockSpec((tb, dp), lambda i: (i, 0)),           # x tile (pipelined, f32)
            pl.BlockSpec((dp, dp), lambda i: (0, 0)),           # w1 (VMEM-resident, bf16)
            pl.BlockSpec((1, dp), lambda i: (0, 0)),            # b1
            pl.BlockSpec((dp, PAD_CLASSES), lambda i: (0, 0)),  # w2 (padded, bf16)
            pl.BlockSpec((1, PAD_CLASSES), lambda i: (0, 0)),   # b2 (padded)
        ],
        out_specs=pl.BlockSpec((tb, PAD_CLASSES), lambda i: (i, 0)),
        compiler_params=compiler_params,
        cost_estimate=cost,
    )(xf, w1t, b1_2d, w2t, b2_pad)

    return out_pad[:B, :NUM_CLASSES].astype(jnp.float32)


def init_params(key, space_length, num_classes=NUM_CLASSES):
    d = space_length ** 2
    k1, k2, k3, k4 = jax.random.split(key, 4)
    # Deterministic uniform init (Kaiming-uniform-like bound 1/sqrt(fan_in)); PyTorch (out, in) layout.
    bound1 = 1.0 / jnp.sqrt(d)
    w1 = jax.random.uniform(k1, (d, d), jnp.float32, -bound1, bound1)
    b1 = jax.random.uniform(k2, (d,), jnp.float32, -bound1, bound1)
    w2 = jax.random.uniform(k3, (num_classes, d), jnp.float32, -bound1, bound1)
    b2 = jax.random.uniform(k4, (num_classes,), jnp.float32, -bound1, bound1)
    return w1, b1, w2, b2


if __name__ == "__main__":
    key = jax.random.PRNGKey(0)
    k_x, k_p = jax.random.split(key)

    B = 2
    space_length = 16  # d = 256
    x = jax.random.normal(k_x, (B, 1, space_length, space_length), jnp.float32)

    w1, b1, w2, b2 = init_params(k_p, space_length)
    params = prepare_params(w1, b1, w2, b2)   # one-time prep, outside the hot path

    out = mlp_forward(x, params)
    out = jax.block_until_ready(out)

    # Reference check in plain JAX (f32 end-to-end; kernel is bf16 on the MXU + bf16 output -> loose tol).
    xf = x.reshape(B, -1)
    h = jnp.maximum(xf @ w1.T + b1, 0.0)
    logits = h @ w2.T + b2
    ref = jax.nn.softmax(logits, axis=1)

    assert out.shape == (B, NUM_CLASSES), out.shape
    assert jnp.allclose(out, ref, atol=2e-2, rtol=2e-2), (out, ref)
    assert jnp.allclose(jnp.sum(out, axis=1), 1.0, atol=2e-2)

    print("KERNEL_OK")
</pallas_src>

<mosaic_0001>
module attributes {stable_mosaic.version = 11 : i64} {
  func.func @mlp_kernel(%arg0: i32, %arg1: memref<8x256xf32, #tpu.memory_space<vmem>>, %arg2: memref<256x256xbf16, #tpu.memory_space<vmem>>, %arg3: memref<1x256xf32, #tpu.memory_space<vmem>>, %arg4: memref<256x128xbf16, #tpu.memory_space<vmem>>, %arg5: memref<1x128xf32, #tpu.memory_space<vmem>>, %arg6: memref<8x128xbf16, #tpu.memory_space<vmem>>) attributes {dimension_semantics = [#tpu.dimension_semantics<parallel>], iteration_bounds = array<i64: 1>, scalar_prefetch = 0 : i64, scratch_operands = 0 : i64, tpu.core_type = #tpu.core_type<tc>, window_params = [{transform_indices = @transform_0, window_bounds = array<i64: 8, 256>}, {pipeline_mode = #tpu.pipeline_mode<synchronous>, transform_indices = @transform_1, window_bounds = array<i64: 256, 256>}, {pipeline_mode = #tpu.pipeline_mode<synchronous>, transform_indices = @transform_2, window_bounds = array<i64: 1, 256>}, {pipeline_mode = #tpu.pipeline_mode<synchronous>, transform_indices = @transform_3, window_bounds = array<i64: 256, 128>}, {pipeline_mode = #tpu.pipeline_mode<synchronous>, transform_indices = @transform_4, window_bounds = array<i64: 1, 128>}, {transform_indices = @transform_5, window_bounds = array<i64: 8, 128>}]} {
    %c0 = arith.constant 0 : index
    %c0_0 = arith.constant 0 : index
    %0 = vector.load %arg1[%c0, %c0_0] : memref<8x256xf32, #tpu.memory_space<vmem>>, vector<8x256xf32>
    %1 = arith.truncf %0 : vector<8x256xf32> to vector<8x256xbf16>
    %c0_1 = arith.constant 0 : index
    %c0_2 = arith.constant 0 : index
    %2 = vector.load %arg2[%c0_1, %c0_2] : memref<256x256xbf16, #tpu.memory_space<vmem>>, vector<256x256xbf16>
    %cst = arith.constant dense<0.000000e+00> : vector<8x256xf32>
    %3 = tpu.matmul %1, %2, %cst {dimension_numbers = #tpu.dot_dimension_numbers<[1], [0], [0], [1], [0, 0, 1, 1], [], []>} : vector<8x256xbf16>, vector<256x256xbf16>, vector<8x256xf32> -> vector<8x256xf32>
    %c0_3 = arith.constant 0 : index
    %c0_4 = arith.constant 0 : index
    %4 = vector.load %arg3[%c0_3, %c0_4] : memref<1x256xf32, #tpu.memory_space<vmem>>, vector<1x256xf32>
    %5 = vector.broadcast %4 : vector<1x256xf32> to vector<8x256xf32>
    %6 = arith.addf %3, %5 : vector<8x256xf32>
    %cst_5 = arith.constant 0.000000e+00 : f32
    %7 = vector.broadcast %cst_5 : f32 to vector<8x256xf32>
    %8 = arith.maximumf %6, %7 : vector<8x256xf32>
    %9 = arith.truncf %8 : vector<8x256xf32> to vector<8x256xbf16>
    %c0_6 = arith.constant 0 : index
    %c0_7 = arith.constant 0 : index
    %10 = vector.load %arg4[%c0_6, %c0_7] : memref<256x128xbf16, #tpu.memory_space<vmem>>, vector<256x128xbf16>
    %cst_8 = arith.constant dense<0.000000e+00> : vector<8x128xf32>
    %11 = tpu.matmul %9, %10, %cst_8 {dimension_numbers = #tpu.dot_dimension_numbers<[1], [0], [0], [1], [0, 0, 1, 1], [], []>} : vector<8x256xbf16>, vector<256x128xbf16>, vector<8x128xf32> -> vector<8x128xf32>
    %c0_9 = arith.constant 0 : index
    %c0_10 = arith.constant 0 : index
    %12 = vector.load %arg5[%c0_9, %c0_10] : memref<1x128xf32, #tpu.memory_space<vmem>>, vector<1x128xf32>
    %13 = vector.broadcast %12 : vector<1x128xf32> to vector<8x128xf32>
    %14 = arith.addf %11, %13 : vector<8x128xf32>
    %cst_11 = arith.constant dense<0xFF800000> : vector<8xf32>
    %15 = vector.multi_reduction <maximumf>, %14, %cst_11 [1] : vector<8x128xf32> to vector<8xf32>
    %16 = vector.shape_cast %15 : vector<8xf32> to vector<8x1xf32>
    %17 = vector.broadcast %16 : vector<8x1xf32> to vector<8x128xf32>
    %18 = arith.subf %14, %17 : vector<8x128xf32>
    %19 = math.exp %18 : vector<8x128xf32>
    %cst_12 = arith.constant dense<0.000000e+00> : vector<8xf32>
    %20 = vector.multi_reduction <add>, %19, %cst_12 [1] : vector<8x128xf32> to vector<8xf32>
    %21 = vector.shape_cast %20 : vector<8xf32> to vector<8x1xf32>
    %22 = tpu.reciprocal %21 {approx = true} : vector<8x1xf32> -> vector<8x1xf32>
    %23 = vector.broadcast %22 : vector<8x1xf32> to vector<8x128xf32>
    %24 = arith.mulf %19, %23 : vector<8x128xf32>
    %25 = arith.truncf %24 : vector<8x128xf32> to vector<8x128xbf16>
    %c0_13 = arith.constant 0 : index
    %c0_14 = arith.constant 0 : index
    %26 = vector.load %arg6[%c0_13, %c0_14] : memref<8x128xbf16, #tpu.memory_space<vmem>>, vector<8x128xbf16>
    tpu.vector_store %arg6[%c0_13, %c0_14], %25 {strides = array<i32>} : memref<8x128xbf16, #tpu.memory_space<vmem>>, vector<8x128xbf16>,
    return
  }
  func.func @transform_0(%arg0: i32) -> (i32, i32) {
    %c0_i32 = arith.constant 0 : i32
    %c0_i32_0 = arith.constant 0 : i32
    return %arg0, %c0_i32 : i32, i32
  }
  func.func @transform_1(%arg0: i32) -> (i32, i32) {
    %c0_i32 = arith.constant 0 : i32
    %c0_i32_0 = arith.constant 0 : i32
    %c0_i32_1 = arith.constant 0 : i32
    return %c0_i32, %c0_i32_0 : i32, i32
  }
  func.func @transform_2(%arg0: i32) -> (i32, i32) {
    %c0_i32 = arith.constant 0 : i32
    %c0_i32_0 = arith.constant 0 : i32
    %c0_i32_1 = arith.constant 0 : i32
    return %c0_i32, %c0_i32_0 : i32, i32
  }
  func.func @transform_3(%arg0: i32) -> (i32, i32) {
    %c0_i32 = arith.constant 0 : i32
    %c0_i32_0 = arith.constant 0 : i32
    %c0_i32_1 = arith.constant 0 : i32
    return %c0_i32, %c0_i32_0 : i32, i32
  }
  func.func @transform_4(%arg0: i32) -> (i32, i32) {
    %c0_i32 = arith.constant 0 : i32
    %c0_i32_0 = arith.constant 0 : i32
    %c0_i32_1 = arith.constant 0 : i32
    return %c0_i32, %c0_i32_0 : i32, i32
  }
  func.func @transform_5(%arg0: i32) -> (i32, i32) {
    %c0_i32 = arith.constant 0 : i32
    %c0_i32_0 = arith.constant 0 : i32
    return %arg0, %c0_i32 : i32, i32
  }
}

</mosaic_0001>

<llo_original>
// kernel: mlp_forward.1
$region0: #{mlp_forward.1}
  #allocation0 [shape = 'u32[]', space=smem, size = 0x4, offset = 0x4, fixed_abs, tag = 'smem constant byte address 0x4 - core index']
  #allocation1 [shape = 'u32[72,128]{1,0:T(1,128)}', space=vmem, size = 0x9000, scoped, tag = 'internal scratch']
  %s0 = inlined_call_operand.vmem [shape: f32[8,256], index: 0, kind: input, shape index: {}]
  %s1 = inlined_call_operand.hbm [shape: bf16[256,256], index: 1, kind: input, shape index: {}]
  %s2 = inlined_call_operand.vmem [shape: f32[1,256], index: 2, kind: input, shape index: {}]
  %s3 = inlined_call_operand.hbm [shape: bf16[256,128], index: 3, kind: input, shape index: {}]
  %s4 = inlined_call_operand.vmem [shape: f32[1,128], index: 4, kind: input, shape index: {}]
  %s5 = inlined_call_operand.vmem [shape: bf16[8,128], index: 5, kind: output, shape index: {}]
  %s6 = sld [smem:[#allocation0]]
  $region38: #{mlp_forward.1} parent=0
    _
  %s8 = ssub.s32 1, %s6
  %s9 = scalar_select 0, %s8, %s6
  $region1: #{mlp_forward.1} parent=0
    #allocation2 [shape = 'u8[131072]{0}', space=vmem, size = 0x20000, scoped, tag = 'input window, operand 1, single buffered']
    #allocation3 [shape = 's32[1]{0}', space=sflag, size = 0x4, scoped, tag = 'scoped memory for mlp_forward.1']
    #allocation4 [shape = 'u8[65536]{0}', space=vmem, size = 0x10000, scoped, tag = 'input window, operand 3, single buffered']
    #allocation5 [shape = 's32[1]{0}', space=sflag, size = 0x4, scoped, tag = 'scoped memory for mlp_forward.1']
    %10 = vsyncpa [#allocation3], 0
    %11 = vsyncpa [#allocation5], 0
    // Predicated region
    $region2: #{mlp_forward.1} parent=1 // pred_check
      _
    $region3: #{mlp_forward.1} parent=1 // pred_check_branch
      %13 = sbr.rel (0) target = $region5
    $region4: #{mlp_forward.1} parent=1 // pred_region
      _
    $region5: #{mlp_forward.1} parent=1 // pred_fallthru
      _
    // Predicated region
    $region6: #{mlp_forward.1} parent=1 // pred_check
      _
    $region7: #{mlp_forward.1} parent=1 // pred_check_branch
      %15 = sbr.rel (0) target = $region9
    $region8: #{mlp_forward.1} parent=1 // pred_region
      %17 = vsyncadd [#allocation3], 0
      %s18 = sshll.u32 %s1, 4
      %s19 = int_to_ptr.hbm [resolvable:$true] %s18
      %s20 = sshll.u32 [#allocation2], 4
      %s21 = int_to_ptr.vmem [resolvable:$true] %s20
      %26 = dma.hbm_to_vmem [thread:$0]  %s19, 4096, %s21, [#allocation3], 128, 128, 8
    $region9: #{mlp_forward.1} parent=1 // pred_fallthru
      _
    // Predicated region
    $region10: #{mlp_forward.1} parent=1 // pred_check
      _
    $region11: #{mlp_forward.1} parent=1 // pred_check_branch
      %28 = sbr.rel (0) target = $region13
    $region12: #{mlp_forward.1} parent=1 // pred_region
      _
    $region13: #{mlp_forward.1} parent=1 // pred_fallthru
      _
    // Predicated region
    $region14: #{mlp_forward.1} parent=1 // pred_check
      _
    $region15: #{mlp_forward.1} parent=1 // pred_check_branch
      %30 = sbr.rel (0) target = $region17
    $region16: #{mlp_forward.1} parent=1 // pred_region
      %32 = vsyncadd [#allocation5], 0
      %s33 = sshll.u32 %s3, 4
      %s34 = int_to_ptr.hbm [resolvable:$true] %s33
      %s35 = sshll.u32 [#allocation4], 4
      %s36 = int_to_ptr.vmem [resolvable:$true] %s35
      %41 = dma.hbm_to_vmem [thread:$0]  %s34, 2048, %s36, [#allocation5], 64, 64, 4
    $region17: #{mlp_forward.1} parent=1 // pred_fallthru
      _
    // Predicated region
    $region18: #{mlp_forward.1} parent=1 // pred_check
      _
    $region19: #{mlp_forward.1} parent=1 // pred_check_branch
      %43 = sbr.rel (0) target = $region21
    $region20: #{mlp_forward.1} parent=1 // pred_region
      _
    $region21: #{mlp_forward.1} parent=1 // pred_fallthru
      _
    // Predicated region
    $region22: #{mlp_forward.1} parent=1 // pred_check
      _
    $region23: #{mlp_forward.1} parent=1 // pred_check_branch
      %45 = sbr.rel (0) target = $region25
    $region24: #{mlp_forward.1} parent=1 // pred_region
      %47 = dma.done [#allocation3], 4096
    $region25: #{mlp_forward.1} parent=1 // pred_fallthru
      _
    // Predicated region
    $region26: #{mlp_forward.1} parent=1 // pred_check
      _
    $region27: #{mlp_forward.1} parent=1 // pred_check_branch
      %49 = sbr.rel (0) target = $region29
    $region28: #{mlp_forward.1} parent=1 // pred_region
      %51 = dma.done [#allocation5], 2048
    $region29: #{mlp_forward.1} parent=1 // pred_fallthru
      _
    %v52 = vld [vmem:[%s0] sm:$0xff]
    %v53 = vld [vmem:[%s0 + $0x8] sm:$0xff]
    %v54 = vpack.c.bf16 %v52, %v52
    %v55 = vpack.c.bf16 %v53, %v53
    %v56 = vld [vmem:[#allocation2] sm:$0xff]
    %v57 = vld [vmem:[#allocation2 + $0x8] sm:$0xff]
    %v58 = vld [vmem:[#allocation2 + $0x10] sm:$0xff]
    %v59 = vld [vmem:[#allocation2 + $0x18] sm:$0xff]
    %v60 = vld [vmem:[#allocation2 + $0x20] sm:$0xff]
    %v61 = vld [vmem:[#allocation2 + $0x28] sm:$0xff]
    %v62 = vld [vmem:[#allocation2 + $0x30] sm:$0xff]
    %v63 = vld [vmem:[#allocation2 + $0x38] sm:$0xff]
    %v64 = vld [vmem:[#allocation2 + $0x40] sm:$0xff]
    %v65 = vld [vmem:[#allocation2 + $0x48] sm:$0xff]
    %v66 = vld [vmem:[#allocation2 + $0x50] sm:$0xff]
    %v67 = vld [vmem:[#allocation2 + $0x58] sm:$0xff]
    %v68 = vld [vmem:[#allocation2 + $0x60] sm:$0xff]
    %v69 = vld [vmem:[#allocation2 + $0x68] sm:$0xff]
    %v70 = vld [vmem:[#allocation2 + $0x70] sm:$0xff]
    %v71 = vld [vmem:[#allocation2 + $0x78] sm:$0xff]
    %v72 = vld [vmem:[#allocation2 + $0x80] sm:$0xff]
    %v73 = vld [vmem:[#allocation2 + $0x88] sm:$0xff]
    %v74 = vld [vmem:[#allocation2 + $0x90] sm:$0xff]
    %v75 = vld [vmem:[#allocation2 + $0x98] sm:$0xff]
    %v76 = vld [vmem:[#allocation2 + $0xa0] sm:$0xff]
    %v77 = vld [vmem:[#allocation2 + $0xa8] sm:$0xff]
    %v78 = vld [vmem:[#allocation2 + $0xb0] sm:$0xff]
    %v79 = vld [vmem:[#allocation2 + $0xb8] sm:$0xff]
    %v80 = vld [vmem:[#allocation2 + $0xc0] sm:$0xff]
    %v81 = vld [vmem:[#allocation2 + $0xc8] sm:$0xff]
    %v82 = vld [vmem:[#allocation2 + $0xd0] sm:$0xff]
    %v83 = vld [vmem:[#allocation2 + $0xd8] sm:$0xff]
    %v84 = vld [vmem:[#allocation2 + $0xe0] sm:$0xff]
    %v85 = vld [vmem:[#allocation2 + $0xe8] sm:$0xff]
    %v86 = vld [vmem:[#allocation2 + $0xf0] sm:$0xff]
    %v87 = vld [vmem:[#allocation2 + $0xf8] sm:$0xff]
    %v88 = vld [vmem:[%s2] sm:$0x3]
    %v90 = vperm.slane %v88, 0
    %v91 = vperm.slane %v88, 1
    %v126 = vunpack.c.l.b16 %v56
    %v127 = vunpack.c.h.b16 %v56
    %v128 = vunpack.c.l.b16 %v57
    %v129 = vunpack.c.h.b16 %v57
    %v130 = vunpack.c.l.b16 %v58
    %v131 = vunpack.c.h.b16 %v58
    %v132 = vunpack.c.l.b16 %v59
    %v133 = vunpack.c.h.b16 %v59
    %v134 = vunpack.c.l.b16 %v60
    %v135 = vunpack.c.h.b16 %v60
    %v136 = vunpack.c.l.b16 %v61
    %v137 = vunpack.c.h.b16 %v61
    %v138 = vunpack.c.l.b16 %v62
    %v139 = vunpack.c.h.b16 %v62
    %v140 = vunpack.c.l.b16 %v63
    %v141 = vunpack.c.h.b16 %v63
    %v142 = vunpack.c.l.b16 %v64
    %v143 = vunpack.c.h.b16 %v64
    %v144 = vunpack.c.l.b16 %v65
    %v145 = vunpack.c.h.b16 %v65
    %v146 = vunpack.c.l.b16 %v66
    %v147 = vunpack.c.h.b16 %v66
    %v148 = vunpack.c.l.b16 %v67
    %v149 = vunpack.c.h.b16 %v67
    %v150 = vunpack.c.l.b16 %v68
    %v151 = vunpack.c.h.b16 %v68
    %v152 = vunpack.c.l.b16 %v69
    %v153 = vunpack.c.h.b16 %v69
    %v154 = vunpack.c.l.b16 %v70
    %v155 = vunpack.c.h.b16 %v70
    %v156 = vunpack.c.l.b16 %v71
    %v157 = vunpack.c.h.b16 %v71
    %v158 = vunpack.c.l.b16 %v72
    %v159 = vunpack.c.h.b16 %v72
    %v160 = vunpack.c.l.b16 %v73
    %v161 = vunpack.c.h.b16 %v73
    %v162 = vunpack.c.l.b16 %v74
    %v163 = vunpack.c.h.b16 %v74
    %v164 = vunpack.c.l.b16 %v75
    %v165 = vunpack.c.h.b16 %v75
    %v166 = vunpack.c.l.b16 %v76
    %v167 = vunpack.c.h.b16 %v76
    %v168 = vunpack.c.l.b16 %v77
    %v169 = vunpack.c.h.b16 %v77
    %v170 = vunpack.c.l.b16 %v78
    %v171 = vunpack.c.h.b16 %v78
    %v172 = vunpack.c.l.b16 %v79
    %v173 = vunpack.c.h.b16 %v79
    %v174 = vunpack.c.l.b16 %v80
    %v175 = vunpack.c.h.b16 %v80
    %v176 = vunpack.c.l.b16 %v81
    %v177 = vunpack.c.h.b16 %v81
    %v178 = vunpack.c.l.b16 %v82
    %v179 = vunpack.c.h.b16 %v82
    %v180 = vunpack.c.l.b16 %v83
    %v181 = vunpack.c.h.b16 %v83
    %v182 = vunpack.c.l.b16 %v84
    %v183 = vunpack.c.h.b16 %v84
    %v184 = vunpack.c.l.b16 %v85
    %v185 = vunpack.c.h.b16 %v85
    %v186 = vunpack.c.l.b16 %v86
    %v187 = vunpack.c.h.b16 %v86
    %v188 = vunpack.c.l.b16 %v87
    %v189 = vunpack.c.h.b16 %v87
    %v190 = vpack.c.b16 %v128, %v126
    %v191 = vpack.c.b16 %v129, %v127
    %v192 = vpack.c.b16 %v132, %v130
    %v193 = vpack.c.b16 %v133, %v131
    %v194 = vpack.c.b16 %v136, %v134
    %v195 = vpack.c.b16 %v137, %v135
    %v196 = vpack.c.b16 %v140, %v138
    %v197 = vpack.c.b16 %v141, %v139
    %v198 = vpack.c.b16 %v144, %v142
    %v199 = vpack.c.b16 %v145, %v143
    %v200 = vpack.c.b16 %v148, %v146
    %v201 = vpack.c.b16 %v149, %v147
    %v202 = vpack.c.b16 %v152, %v150
    %v203 = vpack.c.b16 %v153, %v151
    %v204 = vpack.c.b16 %v156, %v154
    %v205 = vpack.c.b16 %v157, %v155
    %v206 = vpack.c.b16 %v160, %v158
    %v207 = vpack.c.b16 %v161, %v159
    %v208 = vpack.c.b16 %v164, %v162
    %v209 = vpack.c.b16 %v165, %v163
    %v210 = vpack.c.b16 %v168, %v166
    %v211 = vpack.c.b16 %v169, %v167
    %v212 = vpack.c.b16 %v172, %v170
    %v213 = vpack.c.b16 %v173, %v171
    %v214 = vpack.c.b16 %v176, %v174
    %v215 = vpack.c.b16 %v177, %v175
    %v216 = vpack.c.b16 %v180, %v178
    %v217 = vpack.c.b16 %v181, %v179
    %v218 = vpack.c.b16 %v184, %v182
    %v219 = vpack.c.b16 %v185, %v183
    %v220 = vpack.c.b16 %v188, %v186
    %v221 = vpack.c.b16 %v189, %v187
    %254 = vmatpush.bf16.msra.mxu0 %v204
    %255 = vmatpush.bf16.msra.mxu0 %v202
    %256 = vmatpush.bf16.msra.mxu0 %v200
    %257 = vmatpush.bf16.msra.mxu0 %v198
    %258 = vmatpush.bf16.msra.mxu0 %v196
    %259 = vmatpush.bf16.msra.mxu0 %v194
    %260 = vmatpush.bf16.msra.mxu0 %v192
    %261 = vmatpush.bf16.msra.mxu0 %v190
    %262 = vmatmul.bf16.gmra.mxu0 %v54
    %v263 = vpop.f32.mrf.mxu0
    %v264 = vadd.f32 %v90, %v263
    %v265 = vpop.f32.mrf.mxu0
    %266 = vdwg.mxu0
    %267 = vmatpush.bf16.msra.mxu0 %v220
    %268 = vmatpush.bf16.msra.mxu0 %v218
    %269 = vmatpush.bf16.msra.mxu0 %v216
    %270 = vmatpush.bf16.msra.mxu0 %v214
    %271 = vmatpush.bf16.msra.mxu0 %v212
    %272 = vmatpush.bf16.msra.mxu0 %v210
    %273 = vmatpush.bf16.msra.mxu0 %v208
    %274 = vmatpush.bf16.msra.mxu0 %v206
    %275 = vmatmul.bf16.gmra.mxu0 %v55
    %v276 = vpop.f32.mrf.mxu0
    %v277 = vadd.f32 %v264, %v276
    %v278 = vpop.f32.mrf.mxu0
    %279 = vdwg.mxu0
    %280 = vmatpush.bf16.msra.mxu0 %v205
    %281 = vmatpush.bf16.msra.mxu0 %v203
    %282 = vmatpush.bf16.msra.mxu0 %v201
    %283 = vmatpush.bf16.msra.mxu0 %v199
    %284 = vmatpush.bf16.msra.mxu0 %v197
    %285 = vmatpush.bf16.msra.mxu0 %v195
    %286 = vmatpush.bf16.msra.mxu0 %v193
    %287 = vmatpush.bf16.msra.mxu0 %v191
    %288 = vmatmul.bf16.gmra.mxu0 %v54
    %v289 = vpop.f32.mrf.mxu0
    %v290 = vadd.f32 %v91, %v289
    %v291 = vpop.f32.mrf.mxu0
    %292 = vdwg.mxu0
    %293 = vmatpush.bf16.msra.mxu0 %v221
    %294 = vmatpush.bf16.msra.mxu0 %v219
    %295 = vmatpush.bf16.msra.mxu0 %v217
    %296 = vmatpush.bf16.msra.mxu0 %v215
    %297 = vmatpush.bf16.msra.mxu0 %v213
    %298 = vmatpush.bf16.msra.mxu0 %v211
    %299 = vmatpush.bf16.msra.mxu0 %v209
    %300 = vmatpush.bf16.msra.mxu0 %v207
    %301 = vmatmul.bf16.gmra.mxu0 %v55
    %v302 = vpop.f32.mrf.mxu0
    %v303 = vadd.f32 %v290, %v302
    %v304 = vpop.f32.mrf.mxu0
    %305 = vdwg.mxu0
    %v306 = vmax.f32 %v277, 0.0
    %v307 = vmax.f32 %v303, 0.0
    %v308 = vpack.c.bf16 %v306, %v306
    %v309 = vpack.c.bf16 %v307, %v307
    %v310 = vld [vmem:[#allocation4] sm:$0xf]
    %v311 = vld [vmem:[#allocation4 + $0x4] sm:$0xf]
    %v312 = vld [vmem:[#allocation4 + $0x8] sm:$0xf]
    %v313 = vld [vmem:[#allocation4 + $0xc] sm:$0xf]
    %v314 = vld [vmem:[#allocation4 + $0x10] sm:$0xf]
    %v315 = vld [vmem:[#allocation4 + $0x14] sm:$0xf]
    %v316 = vld [vmem:[#allocation4 + $0x18] sm:$0xf]
    %v317 = vld [vmem:[#allocation4 + $0x1c] sm:$0xf]
    %v318 = vld [vmem:[#allocation4 + $0x20] sm:$0xf]
    %v319 = vld [vmem:[#allocation4 + $0x24] sm:$0xf]
    %v320 = vld [vmem:[#allocation4 + $0x28] sm:$0xf]
    %v321 = vld [vmem:[#allocation4 + $0x2c] sm:$0xf]
    %v322 = vld [vmem:[#allocation4 + $0x30] sm:$0xf]
    %v323 = vld [vmem:[#allocation4 + $0x34] sm:$0xf]
    %v324 = vld [vmem:[#allocation4 + $0x38] sm:$0xf]
    %v325 = vld [vmem:[#allocation4 + $0x3c] sm:$0xf]
    %v326 = vld [vmem:[#allocation4 + $0x40] sm:$0xf]
    %v327 = vld [vmem:[#allocation4 + $0x44] sm:$0xf]
    %v328 = vld [vmem:[#allocation4 + $0x48] sm:$0xf]
    %v329 = vld [vmem:[#allocation4 + $0x4c] sm:$0xf]
    %v330 = vld [vmem:[#allocation4 + $0x50] sm:$0xf]
    %v331 = vld [vmem:[#allocation4 + $0x54] sm:$0xf]
    %v332 = vld [vmem:[#allocation4 + $0x58] sm:$0xf]
    %v333 = vld [vmem:[#allocation4 + $0x5c] sm:$0xf]
    %v334 = vld [vmem:[#allocation4 + $0x60] sm:$0xf]
    %v335 = vld [vmem:[#allocation4 + $0x64] sm:$0xf]
    %v336 = vld [vmem:[#allocation4 + $0x68] sm:$0xf]
    %v337 = vld [vmem:[#allocation4 + $0x6c] sm:$0xf]
    %v338 = vld [vmem:[#allocation4 + $0x70] sm:$0xf]
    %v339 = vld [vmem:[#allocation4 + $0x74] sm:$0xf]
    %v340 = vld [vmem:[#allocation4 + $0x78] sm:$0xf]
    %v341 = vld [vmem:[#allocation4 + $0x7c] sm:$0xf]
    %v342 = vld [vmem:[%s4] sm:$0x1]
    %v344 = vperm.slane %v342, 0
    %v378 = vunpack.c.l.b16 %v310
    %v379 = vunpack.c.l.b16 %v311
    %v380 = vunpack.c.l.b16 %v312
    %v381 = vunpack.c.l.b16 %v313
    %v382 = vunpack.c.l.b16 %v314
    %v383 = vunpack.c.l.b16 %v315
    %v384 = vunpack.c.l.b16 %v316
    %v385 = vunpack.c.l.b16 %v317
    %v386 = vunpack.c.l.b16 %v318
    %v387 = vunpack.c.l.b16 %v319
    %v388 = vunpack.c.l.b16 %v320
    %v389 = vunpack.c.l.b16 %v321
    %v390 = vunpack.c.l.b16 %v322
    %v391 = vunpack.c.l.b16 %v323
    %v392 = vunpack.c.l.b16 %v324
    %v393 = vunpack.c.l.b16 %v325
    %v394 = vunpack.c.l.b16 %v326
    %v395 = vunpack.c.l.b16 %v327
    %v396 = vunpack.c.l.b16 %v328
    %v397 = vunpack.c.l.b16 %v329
    %v398 = vunpack.c.l.b16 %v330
    %v399 = vunpack.c.l.b16 %v331
    %v400 = vunpack.c.l.b16 %v332
    %v401 = vunpack.c.l.b16 %v333
    %v402 = vunpack.c.l.b16 %v334
    %v403 = vunpack.c.l.b16 %v335
    %v404 = vunpack.c.l.b16 %v336
    %v405 = vunpack.c.l.b16 %v337
    %v406 = vunpack.c.l.b16 %v338
    %v407 = vunpack.c.l.b16 %v339
    %v408 = vunpack.c.l.b16 %v340
    %v409 = vunpack.c.l.b16 %v341
    %v410 = vpack.c.b16 %v379, %v378
    %v411 = vpack.c.b16 %v381, %v380
    %v412 = vpack.c.b16 %v383, %v382
    %v413 = vpack.c.b16 %v385, %v384
    %v414 = vpack.c.b16 %v387, %v386
    %v415 = vpack.c.b16 %v389, %v388
    %v416 = vpack.c.b16 %v391, %v390
    %v417 = vpack.c.b16 %v393, %v392
    %v418 = vpack.c.b16 %v395, %v394
    %v419 = vpack.c.b16 %v397, %v396
    %v420 = vpack.c.b16 %v399, %v398
    %v421 = vpack.c.b16 %v401, %v400
    %v422 = vpack.c.b16 %v403, %v402
    %v423 = vpack.c.b16 %v405, %v404
    %v424 = vpack.c.b16 %v407, %v406
    %v425 = vpack.c.b16 %v409, %v408
    %442 = vmatpush.bf16.msra.mxu0 %v417
    %443 = vmatpush.bf16.msra.mxu0 %v416
    %444 = vmatpush.bf16.msra.mxu0 %v415
    %445 = vmatpush.bf16.msra.mxu0 %v414
    %446 = vmatpush.bf16.msra.mxu0 %v413
    %447 = vmatpush.bf16.msra.mxu0 %v412
    %448 = vmatpush.bf16.msra.mxu0 %v411
    %449 = vmatpush.bf16.msra.mxu0 %v410
    %450 = vmatmul.bf16.gmra.mxu0 %v308
    %v451 = vpop.f32.mrf.mxu0
    %v452 = vadd.f32 %v344, %v451
    %v453 = vpop.f32.mrf.mxu0
    %454 = vdwg.mxu0
    %455 = vmatpush.bf16.msra.mxu0 %v425
    %456 = vmatpush.bf16.msra.mxu0 %v424
    %457 = vmatpush.bf16.msra.mxu0 %v423
    %458 = vmatpush.bf16.msra.mxu0 %v422
    %459 = vmatpush.bf16.msra.mxu0 %v421
    %460 = vmatpush.bf16.msra.mxu0 %v420
    %461 = vmatpush.bf16.msra.mxu0 %v419
    %462 = vmatpush.bf16.msra.mxu0 %v418
    %463 = vmatmul.bf16.gmra.mxu0 %v309
    %v464 = vpop.f32.mrf.mxu0
    %v465 = vadd.f32 %v452, %v464
    %v466 = vpop.f32.mrf.mxu0
    %467 = vdwg.mxu0
    %468 = vmax.xlane.f32.xlu0 %v465
    %v469 = vpop.xlane.xlu0 %468
    %v470 = vsub.f32 %v465, %v469
    %v471 = vmul.f32 %v470, 1.442695
    %v472 = vpow.pop %v471
    %473 = vadd.xlane.f32.xlu0 %v472
    %v474 = vpop.xlane.xlu0 %473
    %v475 = vrcp.pop %v474
    %v476 = vmul.f32 %v472, %v475
    %v477 = vpack.c.bf16 %v476, %v476
    %478 = vst [vmem:[%s5] sm:$0xf] %v477
    // Predicated region
    $region30: #{mlp_forward.1} parent=1 // pred_check
      _
    $region31: #{mlp_forward.1} parent=1 // pred_check_branch
      %480 = sbr.rel (0) target = $region33
    $region32: #{mlp_forward.1} parent=1 // pred_region
      _
    $region33: #{mlp_forward.1} parent=1 // pred_fallthru
      _
    // Predicated region
    $region34: #{mlp_forward.1} parent=1 // pred_check
      _
    $region35: #{mlp_forward.1} parent=1 // pred_check_branch
      %482 = sbr.rel (0) target = $region37
    $region36: #{mlp_forward.1} parent=1 // pred_region
      _
    $region37: #{mlp_forward.1} parent=1 // pred_fallthru
      _
    %483 = vsyncpa [#allocation3], 1
    %484 = vsyncpa [#allocation5], 1

</llo_original>
